<compile_context>
chip_gen: v7x
topology: tpu7x:2x2x1
jax: 0.10.0
libtpu: 0.0.40
codegen_flags: <defaults>
</compile_context>

<pallas_src>
import numpy as np
import jax
import jax.numpy as jnp
from jax.experimental import pallas as pl
from jax.experimental.pallas import tpu as pltpu

# ----------------------------- small config -------------------------------
BATCH       = 2    # number of input token sequences (graphs)
SEQ_LEN     = 24   # token sequence length fed to build_graph
VOCAB       = 16   # tiny vocab so #unique tokens per doc <= MAX_NODES
MAX_NODES   = 16   # N: padded node count
FEAT_DIM    = 32   # args.feature_dim_size (== word-embedding dim)
HIDDEN      = 32   # args.hidden_size
NUM_LAYERS  = 2    # args.num_GNN_layers
NUM_CLASSES = 2    # args.num_classes
WINDOW      = 3    # args.window_size
OUT_PAD     = 128  # lane-dense padding for packed weight slabs / output


# ----------------------------- Pallas kernel -------------------------------
def gnn_regvd_kernel(feat_ref, adj_ref, mask_ref,
                     w_gc0_ref, w_gc_ref, w_pack_ref, b_pack_ref,
                     prob_ref):
    """One invocation processes the entire batch.

    feat_ref : (B*N, F)      flattened node features
    adj_ref  : (B*N, B*N)    block-diagonal normalized adjacency
    mask_ref : (B*N, H)      node mask pre-broadcast to hidden width
    w_gc0_ref: (F, H)
    w_gc_ref : (L-1, H, H)
    w_pack_ref: (3, H, 128)  [0]=[w_ln | w_att bcast | 0], [1]=[w_dense|0], [2]=[w_out|0]
    b_pack_ref: (3, 128)     matching biases
    prob_ref : (B, 128)      lane-dense padded sigmoid output
    """
    f32 = jnp.float32
    H = HIDDEN
    feat = feat_ref[...]
    adj = adj_ref[...]
    mask = mask_ref[...]

    # --- ReGCN layer 0 ---
    # '* mask' is redundant in the GCN layers: padded adjacency rows are zero,
    # so relu(adj @ s) is already exactly zero on padded nodes.
    s = jnp.dot(feat, w_gc0_ref[...], preferred_element_type=f32)         # (BN, H)
    x = jnp.maximum(jnp.dot(adj, s, preferred_element_type=f32), 0.0)

    # --- residual GCN layers 1..L-1 ---
    for l in range(NUM_LAYERS - 1):
        s = jnp.dot(x, w_gc_ref[l], preferred_element_type=f32)           # (BN, H)
        x = x + jnp.maximum(jnp.dot(adj, s, preferred_element_type=f32), 0.0)

    # --- fused soft-attention pooling (att_op = 'mul') ---
    # One (H, 128) matmul computes both projections:
    #   cols [0:H)  -> x @ w_ln + b_ln
    #   cols [H:2H) -> (x @ w_att + b_att) replicated across H lanes
    pooled = (jnp.dot(x, w_pack_ref[0], preferred_element_type=f32)
              + b_pack_ref[0:1, :])                                       # (BN, 128)
    xl = jnp.tanh(pooled[:, :H])                                          # (BN, H)
    att = jax.nn.sigmoid(pooled[:, H:2 * H])                              # (BN, H)
    xp = att * xl * mask                                                  # (BN, H)

    xp3 = xp.reshape(BATCH, MAX_NODES, H)                                 # (B, N, H)
    g = jnp.sum(xp3, axis=1) * jnp.max(xp3, axis=1)                       # (B, H)

    # --- classification head (dropout = identity in eval) ---
    h_pre = (jnp.dot(g, w_pack_ref[1], preferred_element_type=f32)
             + b_pack_ref[1:2, :])                                        # (B, 128)
    h = jnp.tanh(h_pre[:, :H])                                            # (B, H)
    logits = (jnp.dot(h, w_pack_ref[2], preferred_element_type=f32)
              + b_pack_ref[2:3, :])                                       # (B, 128)
    prob_ref[...] = jax.nn.sigmoid(logits)   # cols >= NUM_CLASSES are discarded


def gnn_regvd_pallas(adj_feature, adj, adj_mask, params):
    B, N, F = adj_feature.shape
    H, C = HIDDEN, NUM_CLASSES
    BN = B * N
    f32 = jnp.float32

    # ---- host/XLA-side layout plumbing (not compute) ----
    feat_flat = adj_feature.reshape(BN, F).astype(f32)
    mask_flat = jnp.broadcast_to(adj_mask, (B, N, H)).reshape(BN, H).astype(f32)
    # Block-diagonal adjacency: one 2-D MXU pass per GCN layer for the whole
    # batch.  (For large B*N, tile the batch axis via the grid instead.)
    adj_bd = jnp.zeros((BN, BN), f32)
    for b in range(B):
        adj_bd = adj_bd.at[b * N:(b + 1) * N, b * N:(b + 1) * N].set(adj[b])

    # ---- pack pooling/head weights into lane-dense slabs ----
    w_pool = jnp.zeros((H, OUT_PAD), f32)
    w_pool = w_pool.at[:, :H].set(params["w_ln"])
    w_pool = w_pool.at[:, H:2 * H].set(jnp.broadcast_to(params["w_att"], (H, H)))
    w_dense_pad = jnp.zeros((H, OUT_PAD), f32).at[:, :H].set(params["w_dense"])
    w_out_pad = jnp.zeros((H, OUT_PAD), f32).at[:, :C].set(params["w_out"])
    w_pack = jnp.stack([w_pool, w_dense_pad, w_out_pad])                  # (3, H, 128)

    b_pool = jnp.zeros((OUT_PAD,), f32)
    b_pool = b_pool.at[:H].set(params["b_ln"][0])
    b_pool = b_pool.at[H:2 * H].set(params["b_att"][0, 0])
    b_dense_pad = jnp.zeros((OUT_PAD,), f32).at[:H].set(params["b_dense"][0])
    b_out_pad = jnp.zeros((OUT_PAD,), f32).at[:C].set(params["b_out"][0])
    b_pack = jnp.stack([b_pool, b_dense_pad, b_out_pad])                  # (3, 128)

    in_specs = [
        pl.BlockSpec((BN, F), lambda g: (0, 0)),                  # features (flat)
        pl.BlockSpec((BN, BN), lambda g: (0, 0)),                 # block-diag adj
        pl.BlockSpec((BN, H), lambda g: (0, 0)),                  # mask (flat, bcast)
        pl.BlockSpec((F, H), lambda g: (0, 0)),                   # w_gc0
        pl.BlockSpec((NUM_LAYERS - 1, H, H), lambda g: (0, 0, 0)),  # w_gc[1:]
        pl.BlockSpec((3, H, OUT_PAD), lambda g: (0, 0, 0)),       # packed weights
        pl.BlockSpec((3, OUT_PAD), lambda g: (0, 0)),             # packed biases
    ]
    out_spec = pl.BlockSpec((B, OUT_PAD), lambda g: (0, 0))

    prob_pad = pl.pallas_call(
        gnn_regvd_kernel,
        out_shape=jax.ShapeDtypeStruct((B, OUT_PAD), f32),
        grid_spec=pltpu.PrefetchScalarGridSpec(
            num_scalar_prefetch=0,
            grid=(1,),                      # whole batch in one step
            in_specs=in_specs,
            out_specs=out_spec,
        ),
        compiler_params=pltpu.CompilerParams(
            dimension_semantics=("parallel",)),   # batch axis shardable on v7x
    )(feat_flat, adj_bd, mask_flat,
      params["w_gc0"], params["w_gc"], w_pack, b_pack)

    return prob_pad[:, :C]


# ------------------- CPU-side graph preprocessing (numpy glue) -------------
def build_graph(input_ids, w_embeddings, window_size):
    """Per-doc token co-occurrence graph over unique tokens (format == 'uni')."""
    adjs, feats = [], []
    for doc in input_ids:
        doc = [int(t) for t in doc]
        vocab, seen = [], set()
        for t in doc:
            if t not in seen:
                seen.add(t)
                vocab.append(t)
        n = len(vocab)
        idmap = {t: i for i, t in enumerate(vocab)}
        a = np.zeros((n, n), dtype=np.float64)
        L = len(doc)
        windows = [doc] if L <= window_size else [
            doc[j:j + window_size] for j in range(L - window_size + 1)]
        for w in windows:
            for p in range(1, len(w)):
                for q in range(p):
                    i, j = idmap[w[p]], idmap[w[q]]
                    if i == j:
                        continue
                    a[i, j] += 1.0
                    a[j, i] += 1.0
        adjs.append(a)
        feats.append(np.asarray(w_embeddings)[np.array(vocab)])
    return adjs, feats


def normalize_adj(a):
    rowsum = a.sum(1)
    with np.errstate(divide="ignore"):
        d_inv_sqrt = np.power(rowsum, -0.5)
    d_inv_sqrt[np.isinf(d_inv_sqrt)] = 0.0
    return a * d_inv_sqrt[:, None] * d_inv_sqrt[None, :]


def preprocess_adj(adjs, max_nodes):
    out = np.zeros((len(adjs), max_nodes, max_nodes), dtype=np.float32)
    mask = np.zeros((len(adjs), max_nodes, 1), dtype=np.float32)
    for i, a in enumerate(adjs):
        n = a.shape[0]
        out[i, :n, :n] = normalize_adj(a)
        mask[i, :n, 0] = 1.0
    return out, mask


def preprocess_features(feats, max_nodes):
    out = np.zeros((len(feats), max_nodes, FEAT_DIM), dtype=np.float32)
    for i, f in enumerate(feats):
        out[i, :f.shape[0]] = f
    return out


# ------------------------------ parameters ---------------------------------
def glorot(key, shape):
    fan_in, fan_out = shape[-2], shape[-1]
    lim = float(np.sqrt(6.0 / (fan_in + fan_out)))
    return jax.random.uniform(key, shape, jnp.float32, -lim, lim)


def init_params(key):
    ks = jax.random.split(key, 10)
    return {
        "w_gc0":   glorot(ks[0], (FEAT_DIM, HIDDEN)),
        "w_gc":    glorot(ks[1], (NUM_LAYERS - 1, HIDDEN, HIDDEN)),
        "w_att":   glorot(ks[2], (HIDDEN, 1)),
        "b_att":   jnp.zeros((1, 1), jnp.float32),
        "w_ln":    glorot(ks[3], (HIDDEN, HIDDEN)),
        "b_ln":    jnp.zeros((1, HIDDEN), jnp.float32),
        "w_dense": glorot(ks[4], (HIDDEN, HIDDEN)),
        "b_dense": jnp.zeros((1, HIDDEN), jnp.float32),
        "w_out":   glorot(ks[5], (HIDDEN, NUM_CLASSES)),
        "b_out":   jnp.zeros((1, NUM_CLASSES), jnp.float32),
    }


# ------------------------------ reference ----------------------------------
def reference_forward(feat, adj, mask, p):
    x = jax.nn.relu(adj @ (feat @ p["w_gc0"])) * mask
    for l in range(NUM_LAYERS - 1):
        x = x + jax.nn.relu(adj @ (x @ p["w_gc"][l])) * mask
    att = jax.nn.sigmoid(x @ p["w_att"] + p["b_att"][0, 0])
    xl = jnp.tanh(x @ p["w_ln"] + p["b_ln"])
    xp = att * xl * mask
    g = jnp.sum(xp, axis=1) * jnp.max(xp, axis=1)
    h = jnp.tanh(g @ p["w_dense"] + p["b_dense"])
    logits = h @ p["w_out"] + p["b_out"]
    return jax.nn.sigmoid(logits)


# --------------------------------- main -------------------------------------
if __name__ == "__main__":
    key = jax.random.PRNGKey(0)
    k_ids, k_emb, k_par, k_lab = jax.random.split(key, 4)

    # deterministic synthetic "tokenizer output" + word embedding table
    input_ids = np.asarray(
        jax.random.randint(k_ids, (BATCH, SEQ_LEN), 0, VOCAB), dtype=np.int64)
    w_embeddings = np.asarray(
        0.02 * jax.random.normal(k_emb, (VOCAB, FEAT_DIM)), dtype=np.float32)

    # GNNReGVD.forward preprocessing (CPU / numpy, as in the PyTorch module)
    adjs, feats = build_graph(input_ids, w_embeddings, window_size=WINDOW)
    adj, adj_mask = preprocess_adj(adjs, MAX_NODES)
    adj_feature = preprocess_features(feats, MAX_NODES)

    adj = jnp.asarray(adj)
    adj_mask = jnp.asarray(adj_mask)
    adj_feature = jnp.asarray(adj_feature)

    params = init_params(k_par)

    # fused ReGCN + pooling + classifier + sigmoid Pallas kernel
    prob = gnn_regvd_pallas(adj_feature, adj, adj_mask, params)
    prob = jax.block_until_ready(prob)

    # optional labels path (plain JAX glue, same as the module)
    labels = jnp.asarray(
        jax.random.randint(k_lab, (BATCH,), 0, 2), dtype=jnp.float32)
    loss = -(jnp.log(prob[:, 0] + 1e-10) * labels
             + jnp.log((1.0 - prob)[:, 0] + 1e-10) * (1.0 - labels)).mean()
    loss = jax.block_until_ready(loss)

    # correctness check against a pure-JAX reference
    ref = reference_forward(adj_feature, adj, adj_mask, params)
    np.testing.assert_allclose(np.asarray(prob), np.asarray(ref),
                               rtol=5e-3, atol=5e-3)
    assert prob.shape == (BATCH, NUM_CLASSES)
    assert np.isfinite(float(loss))

    print("KERNEL_OK")
</pallas_src>

<mosaic_0001>
module attributes {stable_mosaic.version = 11 : i64} {
  func.func @gnn_regvd_kernel(%arg0: i32, %arg1: memref<32x32xf32, #tpu.memory_space<vmem>>, %arg2: memref<32x32xf32, #tpu.memory_space<vmem>>, %arg3: memref<32x32xf32, #tpu.memory_space<vmem>>, %arg4: memref<32x32xf32, #tpu.memory_space<vmem>>, %arg5: memref<1x32x32xf32, #tpu.memory_space<vmem>>, %arg6: memref<3x32x128xf32, #tpu.memory_space<vmem>>, %arg7: memref<3x128xf32, #tpu.memory_space<vmem>>, %arg8: memref<2x128xf32, #tpu.memory_space<vmem>>) attributes {dimension_semantics = [#tpu.dimension_semantics<parallel>], iteration_bounds = array<i64: 1>, scalar_prefetch = 0 : i64, scratch_operands = 0 : i64, tpu.core_type = #tpu.core_type<tc>, window_params = [{pipeline_mode = #tpu.pipeline_mode<synchronous>, transform_indices = @transform_0, window_bounds = array<i64: 32, 32>}, {pipeline_mode = #tpu.pipeline_mode<synchronous>, transform_indices = @transform_1, window_bounds = array<i64: 32, 32>}, {pipeline_mode = #tpu.pipeline_mode<synchronous>, transform_indices = @transform_2, window_bounds = array<i64: 32, 32>}, {pipeline_mode = #tpu.pipeline_mode<synchronous>, transform_indices = @transform_3, window_bounds = array<i64: 32, 32>}, {pipeline_mode = #tpu.pipeline_mode<synchronous>, transform_indices = @transform_4, window_bounds = array<i64: 1, 32, 32>}, {pipeline_mode = #tpu.pipeline_mode<synchronous>, transform_indices = @transform_5, window_bounds = array<i64: 3, 32, 128>}, {pipeline_mode = #tpu.pipeline_mode<synchronous>, transform_indices = @transform_6, window_bounds = array<i64: 3, 128>}, {pipeline_mode = #tpu.pipeline_mode<synchronous>, transform_indices = @transform_7, window_bounds = array<i64: 2, 128>}]} {
    %c0 = arith.constant 0 : index
    %c0_0 = arith.constant 0 : index
    %0 = vector.load %arg1[%c0, %c0_0] : memref<32x32xf32, #tpu.memory_space<vmem>>, vector<32x32xf32>
    %c0_1 = arith.constant 0 : index
    %c0_2 = arith.constant 0 : index
    %1 = vector.load %arg2[%c0_1, %c0_2] : memref<32x32xf32, #tpu.memory_space<vmem>>, vector<32x32xf32>
    %c0_3 = arith.constant 0 : index
    %c0_4 = arith.constant 0 : index
    %2 = vector.load %arg3[%c0_3, %c0_4] : memref<32x32xf32, #tpu.memory_space<vmem>>, vector<32x32xf32>
    %c0_5 = arith.constant 0 : index
    %c0_6 = arith.constant 0 : index
    %3 = vector.load %arg4[%c0_5, %c0_6] : memref<32x32xf32, #tpu.memory_space<vmem>>, vector<32x32xf32>
    %cst = arith.constant dense<0.000000e+00> : vector<32x32xf32>
    %4 = tpu.matmul %0, %3, %cst {dimension_numbers = #tpu.dot_dimension_numbers<[1], [0], [0], [1], [0, 0, 1, 1], [], []>} : vector<32x32xf32>, vector<32x32xf32>, vector<32x32xf32> -> vector<32x32xf32>
    %cst_7 = arith.constant dense<0.000000e+00> : vector<32x32xf32>
    %5 = tpu.matmul %1, %4, %cst_7 {dimension_numbers = #tpu.dot_dimension_numbers<[1], [0], [0], [1], [0, 0, 1, 1], [], []>} : vector<32x32xf32>, vector<32x32xf32>, vector<32x32xf32> -> vector<32x32xf32>
    %cst_8 = arith.constant 0.000000e+00 : f32
    %6 = vector.broadcast %cst_8 : f32 to vector<32x32xf32>
    %7 = arith.maximumf %5, %6 : vector<32x32xf32>
    %c0_9 = arith.constant 0 : index
    %c0_10 = arith.constant 0 : index
    %c0_11 = arith.constant 0 : index
    %8 = vector.load %arg5[%c0_9, %c0_10, %c0_11] : memref<1x32x32xf32, #tpu.memory_space<vmem>>, vector<1x32x32xf32>
    %9 = vector.shape_cast %8 : vector<1x32x32xf32> to vector<32x32xf32>
    %cst_12 = arith.constant dense<0.000000e+00> : vector<32x32xf32>
    %10 = tpu.matmul %7, %9, %cst_12 {dimension_numbers = #tpu.dot_dimension_numbers<[1], [0], [0], [1], [0, 0, 1, 1], [], []>} : vector<32x32xf32>, vector<32x32xf32>, vector<32x32xf32> -> vector<32x32xf32>
    %cst_13 = arith.constant dense<0.000000e+00> : vector<32x32xf32>
    %11 = tpu.matmul %1, %10, %cst_13 {dimension_numbers = #tpu.dot_dimension_numbers<[1], [0], [0], [1], [0, 0, 1, 1], [], []>} : vector<32x32xf32>, vector<32x32xf32>, vector<32x32xf32> -> vector<32x32xf32>
    %cst_14 = arith.constant 0.000000e+00 : f32
    %12 = vector.broadcast %cst_14 : f32 to vector<32x32xf32>
    %13 = arith.maximumf %11, %12 : vector<32x32xf32>
    %14 = arith.addf %7, %13 : vector<32x32xf32>
    %c0_15 = arith.constant 0 : index
    %c0_16 = arith.constant 0 : index
    %c0_17 = arith.constant 0 : index
    %15 = vector.load %arg6[%c0_15, %c0_16, %c0_17] : memref<3x32x128xf32, #tpu.memory_space<vmem>>, vector<1x32x128xf32>
    %16 = vector.shape_cast %15 : vector<1x32x128xf32> to vector<32x128xf32>
    %cst_18 = arith.constant dense<0.000000e+00> : vector<32x128xf32>
    %17 = tpu.matmul %14, %16, %cst_18 {dimension_numbers = #tpu.dot_dimension_numbers<[1], [0], [0], [1], [0, 0, 1, 1], [], []>} : vector<32x32xf32>, vector<32x128xf32>, vector<32x128xf32> -> vector<32x128xf32>
    %c0_19 = arith.constant 0 : index
    %c0_20 = arith.constant 0 : index
    %18 = vector.load %arg7[%c0_19, %c0_20] : memref<3x128xf32, #tpu.memory_space<vmem>>, vector<1x128xf32>
    %19 = vector.broadcast %18 : vector<1x128xf32> to vector<32x128xf32>
    %20 = arith.addf %17, %19 : vector<32x128xf32>
    %21 = vector.extract_strided_slice %20 {offsets = [0, 0], sizes = [32, 32], strides = [1, 1]} : vector<32x128xf32> to vector<32x32xf32>
    %22 = math.tanh %21 : vector<32x32xf32>
    %23 = vector.extract_strided_slice %20 {offsets = [0, 32], sizes = [32, 32], strides = [1, 1]} : vector<32x128xf32> to vector<32x32xf32>
    %24 = arith.negf %23 : vector<32x32xf32>
    %25 = math.exp %24 : vector<32x32xf32>
    %cst_21 = arith.constant 1.000000e+00 : f32
    %26 = vector.broadcast %cst_21 : f32 to vector<32x32xf32>
    %27 = arith.addf %26, %25 : vector<32x32xf32>
    %28 = arith.divf %26, %27 : vector<32x32xf32>
    %29 = arith.mulf %28, %22 : vector<32x32xf32>
    %30 = arith.mulf %29, %2 : vector<32x32xf32>
    %31 = vector.shape_cast %30 : vector<32x32xf32> to vector<2x16x32xf32>
    %cst_22 = arith.constant dense<0.000000e+00> : vector<2x32xf32>
    %32 = vector.multi_reduction <add>, %31, %cst_22 [1] : vector<2x16x32xf32> to vector<2x32xf32>
    %cst_23 = arith.constant dense<0xFF800000> : vector<2x32xf32>
    %33 = vector.multi_reduction <maximumf>, %31, %cst_23 [1] : vector<2x16x32xf32> to vector<2x32xf32>
    %34 = arith.mulf %32, %33 : vector<2x32xf32>
    %c1 = arith.constant 1 : index
    %c0_24 = arith.constant 0 : index
    %c0_25 = arith.constant 0 : index
    %35 = vector.load %arg6[%c1, %c0_24, %c0_25] : memref<3x32x128xf32, #tpu.memory_space<vmem>>, vector<1x32x128xf32>
    %36 = vector.shape_cast %35 : vector<1x32x128xf32> to vector<32x128xf32>
    %cst_26 = arith.constant dense<0.000000e+00> : vector<2x128xf32>
    %37 = tpu.matmul %34, %36, %cst_26 {dimension_numbers = #tpu.dot_dimension_numbers<[1], [0], [0], [1], [0, 0, 1, 1], [], []>} : vector<2x32xf32>, vector<32x128xf32>, vector<2x128xf32> -> vector<2x128xf32>
    %c1_27 = arith.constant 1 : index
    %c0_28 = arith.constant 0 : index
    %38 = vector.load %arg7[%c1_27, %c0_28] : memref<3x128xf32, #tpu.memory_space<vmem>>, vector<1x128xf32>
    %39 = vector.broadcast %38 : vector<1x128xf32> to vector<2x128xf32>
    %40 = arith.addf %37, %39 : vector<2x128xf32>
    %41 = vector.extract_strided_slice %40 {offsets = [0, 0], sizes = [2, 32], strides = [1, 1]} : vector<2x128xf32> to vector<2x32xf32>
    %42 = math.tanh %41 : vector<2x32xf32>
    %c2 = arith.constant 2 : index
    %c0_29 = arith.constant 0 : index
    %c0_30 = arith.constant 0 : index
    %43 = vector.load %arg6[%c2, %c0_29, %c0_30] : memref<3x32x128xf32, #tpu.memory_space<vmem>>, vector<1x32x128xf32>
    %44 = vector.shape_cast %43 : vector<1x32x128xf32> to vector<32x128xf32>
    %cst_31 = arith.constant dense<0.000000e+00> : vector<2x128xf32>
    %45 = tpu.matmul %42, %44, %cst_31 {dimension_numbers = #tpu.dot_dimension_numbers<[1], [0], [0], [1], [0, 0, 1, 1], [], []>} : vector<2x32xf32>, vector<32x128xf32>, vector<2x128xf32> -> vector<2x128xf32>
    %c2_32 = arith.constant 2 : index
    %c0_33 = arith.constant 0 : index
    %46 = vector.load %arg7[%c2_32, %c0_33] : memref<3x128xf32, #tpu.memory_space<vmem>>, vector<1x128xf32>
    %47 = vector.broadcast %46 : vector<1x128xf32> to vector<2x128xf32>
    %48 = arith.addf %45, %47 : vector<2x128xf32>
    %49 = arith.negf %48 : vector<2x128xf32>
    %50 = math.exp %49 : vector<2x128xf32>
    %cst_34 = arith.constant 1.000000e+00 : f32
    %51 = vector.broadcast %cst_34 : f32 to vector<2x128xf32>
    %52 = arith.addf %51, %50 : vector<2x128xf32>
    %53 = arith.divf %51, %52 : vector<2x128xf32>
    %c0_35 = arith.constant 0 : index
    %c0_36 = arith.constant 0 : index
    %54 = vector.load %arg8[%c0_35, %c0_36] : memref<2x128xf32, #tpu.memory_space<vmem>>, vector<2x128xf32>
    tpu.vector_store %arg8[%c0_35, %c0_36], %53 {strides = array<i32>} : memref<2x128xf32, #tpu.memory_space<vmem>>, vector<2x128xf32>,
    return
  }
  func.func @transform_0(%arg0: i32) -> (i32, i32) {
    %c0_i32 = arith.constant 0 : i32
    %c0_i32_0 = arith.constant 0 : i32
    %c0_i32_1 = arith.constant 0 : i32
    return %c0_i32, %c0_i32_0 : i32, i32
  }
  func.func @transform_1(%arg0: i32) -> (i32, i32) {
    %c0_i32 = arith.constant 0 : i32
    %c0_i32_0 = arith.constant 0 : i32
    %c0_i32_1 = arith.constant 0 : i32
    return %c0_i32, %c0_i32_0 : i32, i32
  }
  func.func @transform_2(%arg0: i32) -> (i32, i32) {
    %c0_i32 = arith.constant 0 : i32
    %c0_i32_0 = arith.constant 0 : i32
    %c0_i32_1 = arith.constant 0 : i32
    return %c0_i32, %c0_i32_0 : i32, i32
  }
  func.func @transform_3(%arg0: i32) -> (i32, i32) {
    %c0_i32 = arith.constant 0 : i32
    %c0_i32_0 = arith.constant 0 : i32
    %c0_i32_1 = arith.constant 0 : i32
    return %c0_i32, %c0_i32_0 : i32, i32
  }
  func.func @transform_4(%arg0: i32) -> (i32, i32, i32) {
    %c0_i32 = arith.constant 0 : i32
    %c0_i32_0 = arith.constant 0 : i32
    %c0_i32_1 = arith.constant 0 : i32
    %c0_i32_2 = arith.constant 0 : i32
    return %c0_i32, %c0_i32_0, %c0_i32_1 : i32, i32, i32
  }
  func.func @transform_5(%arg0: i32) -> (i32, i32, i32) {
    %c0_i32 = arith.constant 0 : i32
    %c0_i32_0 = arith.constant 0 : i32
    %c0_i32_1 = arith.constant 0 : i32
    %c0_i32_2 = arith.constant 0 : i32
    return %c0_i32, %c0_i32_0, %c0_i32_1 : i32, i32, i32
  }
  func.func @transform_6(%arg0: i32) -> (i32, i32) {
    %c0_i32 = arith.constant 0 : i32
    %c0_i32_0 = arith.constant 0 : i32
    %c0_i32_1 = arith.constant 0 : i32
    return %c0_i32, %c0_i32_0 : i32, i32
  }
  func.func @transform_7(%arg0: i32) -> (i32, i32) {
    %c0_i32 = arith.constant 0 : i32
    %c0_i32_0 = arith.constant 0 : i32
    %c0_i32_1 = arith.constant 0 : i32
    return %c0_i32, %c0_i32_0 : i32, i32
  }
}

</mosaic_0001>

<llo_original>
// kernel: tpu_custom_call.1
$region0: #{tpu_custom_call.1}
  #allocation0 [shape = 'u32[]', space=smem, size = 0x4, offset = 0x4, fixed_abs, tag = 'smem constant byte address 0x4 - core index']
  #allocation1 [shape = 'u32[144,128]{1,0:T(1,128)}', space=vmem, size = 0x12000, scoped, tag = 'internal scratch']
  %s0 = inlined_call_operand.hbm [shape: f32[32,32], index: 0, kind: input, shape index: {}]
  %s1 = inlined_call_operand.hbm [shape: f32[32,32], index: 1, kind: input, shape index: {}]
  %s2 = inlined_call_operand.hbm [shape: f32[32,32], index: 2, kind: input, shape index: {}]
  %s3 = inlined_call_operand.hbm [shape: f32[32,32], index: 3, kind: input, shape index: {}]
  %s4 = inlined_call_operand.hbm [shape: f32[1,32,32], index: 4, kind: input, shape index: {}]
  %s5 = inlined_call_operand.hbm [shape: f32[3,32,128], index: 5, kind: input, shape index: {}]
  %s6 = inlined_call_operand.vmem [shape: f32[3,128], index: 6, kind: input, shape index: {}]
  %s7 = inlined_call_operand.hbm [shape: f32[2,128], index: 7, kind: output, shape index: {}]
  %s8 = sld [smem:[#allocation0]]
  $region62: #{tpu_custom_call.1} parent=0
    _
  %s10 = ssub.s32 1, %s8
  %s11 = scalar_select 0, %s10, %s8
  $region1: #{tpu_custom_call.1} parent=0
    #allocation2 [shape = 'u8[16384]{0}', space=vmem, size = 0x4000, scoped, tag = 'input window, operand 0, single buffered']
    #allocation3 [shape = 's32[1]{0}', space=sflag, size = 0x4, scoped, tag = 'scoped memory for tpu_custom_call.1']
    #allocation4 [shape = 's32[1]{0}', space=sflag, size = 0x4, scoped, tag = 'scoped memory for tpu_custom_call.1']
    #allocation5 [shape = 'u8[16384]{0}', space=vmem, size = 0x4000, scoped, tag = 'input window, operand 1, single buffered']
    #allocation6 [shape = 's32[1]{0}', space=sflag, size = 0x4, scoped, tag = 'scoped memory for tpu_custom_call.1']
    #allocation7 [shape = 'u8[16384]{0}', space=vmem, size = 0x4000, scoped, tag = 'input window, operand 2, single buffered']
    #allocation8 [shape = 'u8[16384]{0}', space=vmem, size = 0x4000, scoped, tag = 'input window, operand 3, single buffered']
    #allocation9 [shape = 's32[1]{0}', space=sflag, size = 0x4, scoped, tag = 'scoped memory for tpu_custom_call.1']
    #allocation10 [shape = 'u8[16384]{0}', space=vmem, size = 0x4000, scoped, tag = 'input window, operand 4, single buffered']
    #allocation11 [shape = 'u8[49152]{0}', space=vmem, size = 0xc000, scoped, tag = 'input window, operand 5, single buffered']
    #allocation12 [shape = 's32[1]{0}', space=sflag, size = 0x4, scoped, tag = 'scoped memory for tpu_custom_call.1']
    #allocation13 [shape = 'u8[1024]{0}', space=vmem, size = 0x400, scoped, tag = 'output window, operand 0, single buffered']
    %12 = vsyncpa [#allocation3], 0
    %13 = vsyncpa [#allocation6], 0
    %14 = vsyncpa [#allocation9], 0
    %15 = vsyncpa [#allocation12], 0
    %16 = vsyncpa [#allocation4], 0
    // Predicated region
    $region2: #{tpu_custom_call.1} parent=1 // pred_check
      _
    $region3: #{tpu_custom_call.1} parent=1 // pred_check_branch
      %18 = sbr.rel (0) target = $region5
    $region4: #{tpu_custom_call.1} parent=1 // pred_region
      %s20 = ssub.s32 512, 512
      %21 = vsyncadd [#allocation3], %s20
      %s22 = sshll.u32 [#allocation2], 4
      %s23 = int_to_ptr.vmem [resolvable:$true] %s22
      %28 = dma.hbm_to_vmem [thread:$0]  %s0, 512, %s23, [#allocation3], 128, 128, 8
    $region5: #{tpu_custom_call.1} parent=1 // pred_fallthru
      _
    // Predicated region
    $region6: #{tpu_custom_call.1} parent=1 // pred_check
      _
    $region7: #{tpu_custom_call.1} parent=1 // pred_check_branch
      %30 = sbr.rel (0) target = $region9
    $region8: #{tpu_custom_call.1} parent=1 // pred_region
      %s32 = ssub.s32 512, 512
      %33 = vsyncadd [#allocation6], %s32
      %s34 = sshll.u32 [#allocation5], 4
      %s35 = int_to_ptr.vmem [resolvable:$true] %s34
      %40 = dma.hbm_to_vmem [thread:$0]  %s1, 512, %s35, [#allocation6], 128, 128, 8
    $region9: #{tpu_custom_call.1} parent=1 // pred_fallthru
      _
    // Predicated region
    $region10: #{tpu_custom_call.1} parent=1 // pred_check
      _
    $region11: #{tpu_custom_call.1} parent=1 // pred_check_branch
      %42 = sbr.rel (0) target = $region13
    $region12: #{tpu_custom_call.1} parent=1 // pred_region
      %s44 = ssub.s32 512, 512
      %45 = vsyncadd [#allocation6], %s44
      %s46 = sshll.u32 [#allocation7], 4
      %s47 = int_to_ptr.vmem [resolvable:$true] %s46
      %52 = dma.hbm_to_vmem [thread:$0]  %s2, 512, %s47, [#allocation6], 128, 128, 8
    $region13: #{tpu_custom_call.1} parent=1 // pred_fallthru
      _
    // Predicated region
    $region14: #{tpu_custom_call.1} parent=1 // pred_check
      _
    $region15: #{tpu_custom_call.1} parent=1 // pred_check_branch
      %54 = sbr.rel (0) target = $region17
    $region16: #{tpu_custom_call.1} parent=1 // pred_region
      %s56 = ssub.s32 512, 512
      %57 = vsyncadd [#allocation9], %s56
      %s58 = sshll.u32 [#allocation8], 4
      %s59 = int_to_ptr.vmem [resolvable:$true] %s58
      %64 = dma.hbm_to_vmem [thread:$0]  %s3, 512, %s59, [#allocation9], 128, 128, 8
    $region17: #{tpu_custom_call.1} parent=1 // pred_fallthru
      _
    // Predicated region
    $region18: #{tpu_custom_call.1} parent=1 // pred_check
      _
    $region19: #{tpu_custom_call.1} parent=1 // pred_check_branch
      %66 = sbr.rel (0) target = $region21
    $region20: #{tpu_custom_call.1} parent=1 // pred_region
      %s68 = ssub.s32 512, 512
      %69 = vsyncadd [#allocation9], %s68
      %s70 = sshll.u32 [#allocation10], 4
      %s71 = int_to_ptr.vmem [resolvable:$true] %s70
      %76 = dma.hbm_to_vmem [thread:$0]  %s4, 512, %s71, [#allocation9], 128, 128, 8
    $region21: #{tpu_custom_call.1} parent=1 // pred_fallthru
      _
    // Predicated region
    $region22: #{tpu_custom_call.1} parent=1 // pred_check
      _
    $region23: #{tpu_custom_call.1} parent=1 // pred_check_branch
      %78 = sbr.rel (0) target = $region25
    $region24: #{tpu_custom_call.1} parent=1 // pred_region
      %s80 = ssub.s32 1536, 1536
      %81 = vsyncadd [#allocation12], %s80
      %s82 = sshll.u32 [#allocation11], 4
      %s83 = int_to_ptr.vmem [resolvable:$true] %s82
      %88 = dma.hbm_to_vmem [thread:$0]  %s5, 1536, %s83, [#allocation12], 128, 128, 8
    $region25: #{tpu_custom_call.1} parent=1 // pred_fallthru
      _
    // Predicated region
    $region26: #{tpu_custom_call.1} parent=1 // pred_check
      _
    $region27: #{tpu_custom_call.1} parent=1 // pred_check_branch
      %90 = sbr.rel (0) target = $region29
    $region28: #{tpu_custom_call.1} parent=1 // pred_region
      _
    $region29: #{tpu_custom_call.1} parent=1 // pred_fallthru
      _
    // Predicated region
    $region30: #{tpu_custom_call.1} parent=1 // pred_check
      _
    $region31: #{tpu_custom_call.1} parent=1 // pred_check_branch
      %92 = sbr.rel (0) target = $region33
    $region32: #{tpu_custom_call.1} parent=1 // pred_region
      %93 = dma.done [#allocation3], 512
    $region33: #{tpu_custom_call.1} parent=1 // pred_fallthru
      _
    // Predicated region
    $region34: #{tpu_custom_call.1} parent=1 // pred_check
      _
    $region35: #{tpu_custom_call.1} parent=1 // pred_check_branch
      %95 = sbr.rel (0) target = $region37
    $region36: #{tpu_custom_call.1} parent=1 // pred_region
      %96 = dma.done [#allocation6], 512
    $region37: #{tpu_custom_call.1} parent=1 // pred_fallthru
      _
    // Predicated region
    $region38: #{tpu_custom_call.1} parent=1 // pred_check
      _
    $region39: #{tpu_custom_call.1} parent=1 // pred_check_branch
      %98 = sbr.rel (0) target = $region41
    $region40: #{tpu_custom_call.1} parent=1 // pred_region
      %99 = dma.done [#allocation6], 512
    $region41: #{tpu_custom_call.1} parent=1 // pred_fallthru
      _
    // Predicated region
    $region42: #{tpu_custom_call.1} parent=1 // pred_check
      _
    $region43: #{tpu_custom_call.1} parent=1 // pred_check_branch
      %101 = sbr.rel (0) target = $region45
    $region44: #{tpu_custom_call.1} parent=1 // pred_region
      %102 = dma.done [#allocation9], 512
    $region45: #{tpu_custom_call.1} parent=1 // pred_fallthru
      _
    // Predicated region
    $region46: #{tpu_custom_call.1} parent=1 // pred_check
      _
    $region47: #{tpu_custom_call.1} parent=1 // pred_check_branch
      %104 = sbr.rel (0) target = $region49
    $region48: #{tpu_custom_call.1} parent=1 // pred_region
      %105 = dma.done [#allocation9], 512
    $region49: #{tpu_custom_call.1} parent=1 // pred_fallthru
      _
    // Predicated region
    $region50: #{tpu_custom_call.1} parent=1 // pred_check
      _
    $region51: #{tpu_custom_call.1} parent=1 // pred_check_branch
      %107 = sbr.rel (0) target = $region53
    $region52: #{tpu_custom_call.1} parent=1 // pred_region
      %108 = dma.done [#allocation12], 1536
    $region53: #{tpu_custom_call.1} parent=1 // pred_fallthru
      _
    %v109 = vld [vmem:[#allocation2] sm:$0xff]
    %v110 = vld [vmem:[#allocation2 + $0x8] sm:$0xff]
    %v111 = vld [vmem:[#allocation2 + $0x10] sm:$0xff]
    %v112 = vld [vmem:[#allocation2 + $0x18] sm:$0xff]
    %v113 = vld [vmem:[#allocation5] sm:$0xff]
    %v114 = vld [vmem:[#allocation5 + $0x8] sm:$0xff]
    %v115 = vld [vmem:[#allocation5 + $0x10] sm:$0xff]
    %v116 = vld [vmem:[#allocation5 + $0x18] sm:$0xff]
    %v117 = vld [vmem:[#allocation7] sm:$0xff]
    %v118 = vld [vmem:[#allocation7 + $0x8] sm:$0xff]
    %v119 = vld [vmem:[#allocation7 + $0x10] sm:$0xff]
    %v120 = vld [vmem:[#allocation7 + $0x18] sm:$0xff]
    %v121 = vld [vmem:[#allocation8] sm:$0xff]
    %v122 = vld [vmem:[#allocation8 + $0x8] sm:$0xff]
    %v123 = vld [vmem:[#allocation8 + $0x10] sm:$0xff]
    %v124 = vld [vmem:[#allocation8 + $0x18] sm:$0xff]
    %vm125 = vcmask 261120
    %v127 = vsel %vm125, %v109, 0
    %v130 = vsel %vm125, %v110, 0
    %v133 = vsel %vm125, %v111, 0
    %v136 = vsel %vm125, %v112, 0
    %138 = vmatprep.subr.mxu0 0.0
    %139 = vmatpush1.msra.mxu0 %v121
    %140 = vmatprep.subr.mxu0 0.0
    %141 = vmatpush1.msra.mxu0 %v122
    %142 = vmatprep.subr.mxu0 0.0
    %143 = vmatpush1.msra.mxu0 %v123
    %144 = vmatprep.subr.mxu0 0.0
    %145 = vmatpush1.msra.mxu0 %v124
    %146 = vmatprep.subr.mxu0 0.0
    %147 = vmatpush1.msra.mxu0 0.0
    %148 = vmatprep.subr.mxu0 0.0
    %149 = vmatpush1.msra.mxu0 0.0
    %150 = vmatprep.subr.mxu0 0.0
    %151 = vmatpush1.msra.mxu0 0.0
    %152 = vmatprep.subr.mxu0 0.0
    %153 = vmatpush1.msra.mxu0 0.0
    %154 = vmatprep.subr.mxu0 0.0
    %155 = vmatpush1.msra.mxu0 0.0
    %156 = vmatprep.subr.mxu0 0.0
    %157 = vmatpush1.msra.mxu0 0.0
    %158 = vmatprep.subr.mxu0 0.0
    %159 = vmatpush1.msra.mxu0 0.0
    %160 = vmatprep.subr.mxu0 0.0
    %161 = vmatpush1.msra.mxu0 0.0
    %162 = vmatprep.subr.mxu0 0.0
    %163 = vmatpush1.msra.mxu0 0.0
    %164 = vmatprep.subr.mxu0 0.0
    %165 = vmatpush1.msra.mxu0 0.0
    %166 = vmatprep.subr.mxu0 0.0
    %167 = vmatpush1.msra.mxu0 0.0
    %168 = vmatprep.subr.mxu0 0.0
    %169 = vmatpush1.msra.mxu0 0.0
    %170 = vmatprep.subr.mxu0 0.0
    %171 = vmatpush1.msra.mxu0 0.0
    %172 = vmatprep.subr.mxu0 0.0
    %173 = vmatpush1.msra.mxu0 0.0
    %174 = vmatprep.subr.mxu0 0.0
    %175 = vmatpush1.msra.mxu0 0.0
    %176 = vmatprep.subr.mxu0 0.0
    %177 = vmatpush1.msra.mxu0 0.0
    %178 = vmatprep.subr.mxu0 0.0
    %179 = vmatpush1.msra.mxu0 0.0
    %180 = vmatprep.subr.mxu0 0.0
    %181 = vmatpush1.msra.mxu0 0.0
    %182 = vmatprep.subr.mxu0 0.0
    %183 = vmatpush1.msra.mxu0 0.0
    %184 = vmatprep.subr.mxu0 0.0
    %185 = vmatpush1.msra.mxu0 0.0
    %186 = vmatprep.subr.mxu0 0.0
    %187 = vmatpush1.msra.mxu0 0.0
    %188 = vmatprep.subr.mxu0 0.0
    %189 = vmatpush1.msra.mxu0 0.0
    %190 = vmatprep.subr.mxu0 0.0
    %191 = vmatpush1.msra.mxu0 0.0
    %192 = vmatprep.subr.mxu0 0.0
    %193 = vmatpush1.msra.mxu0 0.0
    %194 = vmatprep.subr.mxu0 0.0
    %195 = vmatpush1.msra.mxu0 0.0
    %196 = vmatprep.subr.mxu0 0.0
    %197 = vmatpush1.msra.mxu0 0.0
    %198 = vmatprep.subr.mxu0 0.0
    %199 = vmatpush1.msra.mxu0 0.0
    %200 = vmatprep.subr.mxu0 0.0
    %201 = vmatpush1.msra.mxu0 0.0
    %202 = vmatprep.mubr.f32.mxu0 0.0
    %203 = vmatmul.mubr.f32.gmra.mrb[0].mxu0 %v127
    %v204 = vpop.f32.mrb[0].mxu0
    %v205 = vadd.f32 0.0, %v204
    %v206 = vpop.f32.mrb[0].mxu0
    %207 = vmatprep.mubr.f32.mxu0 0.0
    %208 = vmatmul.mubr.f32.gmra.mrb[0].mxu0 %v130
    %v209 = vpop.f32.mrb[0].mxu0
    %v210 = vadd.f32 0.0, %v209
    %v211 = vpop.f32.mrb[0].mxu0
    %212 = vmatprep.mubr.f32.mxu0 0.0
    %213 = vmatmul.mubr.f32.gmra.mrb[0].mxu0 %v133
    %v214 = vpop.f32.mrb[0].mxu0
    %v215 = vadd.f32 0.0, %v214
    %v216 = vpop.f32.mrb[0].mxu0
    %217 = vmatprep.mubr.f32.mxu0 0.0
    %218 = vmatmul.mubr.f32.gmra.mrb[0].mxu0 %v136
    %v219 = vpop.f32.mrb[0].mxu0
    %v220 = vadd.f32 0.0, %v219
    %v221 = vpop.f32.mrb[0].mxu0
    %222 = vdwg.mxu0
    %v224 = vsel %vm125, %v113, 0
    %v227 = vsel %vm125, %v114, 0
    %v230 = vsel %vm125, %v115, 0
    %v233 = vsel %vm125, %v116, 0
    %235 = vmatprep.subr.mxu0 0.0
    %236 = vmatpush1.msra.mxu0 %v205
    %237 = vmatprep.subr.mxu0 0.0
    %238 = vmatpush1.msra.mxu0 %v210
    %239 = vmatprep.subr.mxu0 0.0
    %240 = vmatpush1.msra.mxu0 %v215
    %241 = vmatprep.subr.mxu0 0.0
    %242 = vmatpush1.msra.mxu0 %v220
    %243 = vmatprep.subr.mxu0 0.0
    %244 = vmatpush1.msra.mxu0 0.0
    %245 = vmatprep.subr.mxu0 0.0
    %246 = vmatpush1.msra.mxu0 0.0
    %247 = vmatprep.subr.mxu0 0.0
    %248 = vmatpush1.msra.mxu0 0.0
    %249 = vmatprep.subr.mxu0 0.0
    %250 = vmatpush1.msra.mxu0 0.0
    %251 = vmatprep.subr.mxu0 0.0
    %252 = vmatpush1.msra.mxu0 0.0
    %253 = vmatprep.subr.mxu0 0.0
    %254 = vmatpush1.msra.mxu0 0.0
    %255 = vmatprep.subr.mxu0 0.0
    %256 = vmatpush1.msra.mxu0 0.0
    %257 = vmatprep.subr.mxu0 0.0
    %258 = vmatpush1.msra.mxu0 0.0
    %259 = vmatprep.subr.mxu0 0.0
    %260 = vmatpush1.msra.mxu0 0.0
    %261 = vmatprep.subr.mxu0 0.0
    %262 = vmatpush1.msra.mxu0 0.0
    %263 = vmatprep.subr.mxu0 0.0
    %264 = vmatpush1.msra.mxu0 0.0
    %265 = vmatprep.subr.mxu0 0.0
    %266 = vmatpush1.msra.mxu0 0.0
    %267 = vmatprep.subr.mxu0 0.0
    %268 = vmatpush1.msra.mxu0 0.0
    %269 = vmatprep.subr.mxu0 0.0
    %270 = vmatpush1.msra.mxu0 0.0
    %271 = vmatprep.subr.mxu0 0.0
    %272 = vmatpush1.msra.mxu0 0.0
    %273 = vmatprep.subr.mxu0 0.0
    %274 = vmatpush1.msra.mxu0 0.0
    %275 = vmatprep.subr.mxu0 0.0
    %276 = vmatpush1.msra.mxu0 0.0
    %277 = vmatprep.subr.mxu0 0.0
    %278 = vmatpush1.msra.mxu0 0.0
    %279 = vmatprep.subr.mxu0 0.0
    %280 = vmatpush1.msra.mxu0 0.0
    %281 = vmatprep.subr.mxu0 0.0
    %282 = vmatpush1.msra.mxu0 0.0
    %283 = vmatprep.subr.mxu0 0.0
    %284 = vmatpush1.msra.mxu0 0.0
    %285 = vmatprep.subr.mxu0 0.0
    %286 = vmatpush1.msra.mxu0 0.0
    %287 = vmatprep.subr.mxu0 0.0
    %288 = vmatpush1.msra.mxu0 0.0
    %289 = vmatprep.subr.mxu0 0.0
    %290 = vmatpush1.msra.mxu0 0.0
    %291 = vmatprep.subr.mxu0 0.0
    %292 = vmatpush1.msra.mxu0 0.0
    %293 = vmatprep.subr.mxu0 0.0
    %294 = vmatpush1.msra.mxu0 0.0
    %295 = vmatprep.subr.mxu0 0.0
    %296 = vmatpush1.msra.mxu0 0.0
    %297 = vmatprep.subr.mxu0 0.0
    %298 = vmatpush1.msra.mxu0 0.0
    %299 = vmatprep.mubr.f32.mxu0 0.0
    %300 = vmatmul.mubr.f32.gmra.mrb[0].mxu0 %v224
    %v301 = vpop.f32.mrb[0].mxu0
    %v302 = vadd.f32 0.0, %v301
    %v303 = vpop.f32.mrb[0].mxu0
    %304 = vmatprep.mubr.f32.mxu0 0.0
    %305 = vmatmul.mubr.f32.gmra.mrb[0].mxu0 %v227
    %v306 = vpop.f32.mrb[0].mxu0
    %v307 = vadd.f32 0.0, %v306
    %v308 = vpop.f32.mrb[0].mxu0
    %309 = vmatprep.mubr.f32.mxu0 0.0
    %310 = vmatmul.mubr.f32.gmra.mrb[0].mxu0 %v230
    %v311 = vpop.f32.mrb[0].mxu0
    %v312 = vadd.f32 0.0, %v311
    %v313 = vpop.f32.mrb[0].mxu0
    %314 = vmatprep.mubr.f32.mxu0 0.0
    %315 = vmatmul.mubr.f32.gmra.mrb[0].mxu0 %v233
    %v316 = vpop.f32.mrb[0].mxu0
    %v317 = vadd.f32 0.0, %v316
    %v318 = vpop.f32.mrb[0].mxu0
    %319 = vdwg.mxu0
    %v320 = vmax.f32 %v302, 0.0
    %v321 = vmax.f32 %v307, 0.0
    %v322 = vmax.f32 %v312, 0.0
    %v323 = vmax.f32 %v317, 0.0
    %v324 = vld [vmem:[#allocation10] sm:$0xff]
    %v325 = vld [vmem:[#allocation10 + $0x8] sm:$0xff]
    %v326 = vld [vmem:[#allocation10 + $0x10] sm:$0xff]
    %v327 = vld [vmem:[#allocation10 + $0x18] sm:$0xff]
    %v329 = vsel %vm125, %v320, 0
    %v332 = vsel %vm125, %v321, 0
    %v335 = vsel %vm125, %v322, 0
    %v338 = vsel %vm125, %v323, 0
    %340 = vmatprep.subr.mxu0 0.0
    %341 = vmatpush1.msra.mxu0 %v324
    %342 = vmatprep.subr.mxu0 0.0
    %343 = vmatpush1.msra.mxu0 %v325
    %344 = vmatprep.subr.mxu0 0.0
    %345 = vmatpush1.msra.mxu0 %v326
    %346 = vmatprep.subr.mxu0 0.0
    %347 = vmatpush1.msra.mxu0 %v327
    %348 = vmatprep.subr.mxu0 0.0
    %349 = vmatpush1.msra.mxu0 0.0
    %350 = vmatprep.subr.mxu0 0.0
    %351 = vmatpush1.msra.mxu0 0.0
    %352 = vmatprep.subr.mxu0 0.0
    %353 = vmatpush1.msra.mxu0 0.0
    %354 = vmatprep.subr.mxu0 0.0
    %355 = vmatpush1.msra.mxu0 0.0
    %356 = vmatprep.subr.mxu0 0.0
    %357 = vmatpush1.msra.mxu0 0.0
    %358 = vmatprep.subr.mxu0 0.0
    %359 = vmatpush1.msra.mxu0 0.0
    %360 = vmatprep.subr.mxu0 0.0
    %361 = vmatpush1.msra.mxu0 0.0
    %362 = vmatprep.subr.mxu0 0.0
    %363 = vmatpush1.msra.mxu0 0.0
    %364 = vmatprep.subr.mxu0 0.0
    %365 = vmatpush1.msra.mxu0 0.0
    %366 = vmatprep.subr.mxu0 0.0
    %367 = vmatpush1.msra.mxu0 0.0
    %368 = vmatprep.subr.mxu0 0.0
    %369 = vmatpush1.msra.mxu0 0.0
    %370 = vmatprep.subr.mxu0 0.0
    %371 = vmatpush1.msra.mxu0 0.0
    %372 = vmatprep.subr.mxu0 0.0
    %373 = vmatpush1.msra.mxu0 0.0
    %374 = vmatprep.subr.mxu0 0.0
    %375 = vmatpush1.msra.mxu0 0.0
    %376 = vmatprep.subr.mxu0 0.0
    %377 = vmatpush1.msra.mxu0 0.0
    %378 = vmatprep.subr.mxu0 0.0
    %379 = vmatpush1.msra.mxu0 0.0
    %380 = vmatprep.subr.mxu0 0.0
    %381 = vmatpush1.msra.mxu0 0.0
    %382 = vmatprep.subr.mxu0 0.0
    %383 = vmatpush1.msra.mxu0 0.0
    %384 = vmatprep.subr.mxu0 0.0
    %385 = vmatpush1.msra.mxu0 0.0
    %386 = vmatprep.subr.mxu0 0.0
    %387 = vmatpush1.msra.mxu0 0.0
    %388 = vmatprep.subr.mxu0 0.0
    %389 = vmatpush1.msra.mxu0 0.0
    %390 = vmatprep.subr.mxu0 0.0
    %391 = vmatpush1.msra.mxu0 0.0
    %392 = vmatprep.subr.mxu0 0.0
    %393 = vmatpush1.msra.mxu0 0.0
    %394 = vmatprep.subr.mxu0 0.0
    %395 = vmatpush1.msra.mxu0 0.0
    %396 = vmatprep.subr.mxu0 0.0
    %397 = vmatpush1.msra.mxu0 0.0
    %398 = vmatprep.subr.mxu0 0.0
    %399 = vmatpush1.msra.mxu0 0.0
    %400 = vmatprep.subr.mxu0 0.0
    %401 = vmatpush1.msra.mxu0 0.0
    %402 = vmatprep.subr.mxu0 0.0
    %403 = vmatpush1.msra.mxu0 0.0
    %404 = vmatprep.mubr.f32.mxu0 0.0
    %405 = vmatmul.mubr.f32.gmra.mrb[0].mxu0 %v329
    %v406 = vpop.f32.mrb[0].mxu0
    %v407 = vadd.f32 0.0, %v406
    %v408 = vpop.f32.mrb[0].mxu0
    %409 = vmatprep.mubr.f32.mxu0 0.0
    %410 = vmatmul.mubr.f32.gmra.mrb[0].mxu0 %v332
    %v411 = vpop.f32.mrb[0].mxu0
    %v412 = vadd.f32 0.0, %v411
    %v413 = vpop.f32.mrb[0].mxu0
    %414 = vmatprep.mubr.f32.mxu0 0.0
    %415 = vmatmul.mubr.f32.gmra.mrb[0].mxu0 %v335
    %v416 = vpop.f32.mrb[0].mxu0
    %v417 = vadd.f32 0.0, %v416
    %v418 = vpop.f32.mrb[0].mxu0
    %419 = vmatprep.mubr.f32.mxu0 0.0
    %420 = vmatmul.mubr.f32.gmra.mrb[0].mxu0 %v338
    %v421 = vpop.f32.mrb[0].mxu0
    %v422 = vadd.f32 0.0, %v421
    %v423 = vpop.f32.mrb[0].mxu0
    %424 = vdwg.mxu0
    %425 = vmatprep.subr.mxu0 0.0
    %426 = vmatpush1.msra.mxu0 %v407
    %427 = vmatprep.subr.mxu0 0.0
    %428 = vmatpush1.msra.mxu0 %v412
    %429 = vmatprep.subr.mxu0 0.0
    %430 = vmatpush1.msra.mxu0 %v417
    %431 = vmatprep.subr.mxu0 0.0
    %432 = vmatpush1.msra.mxu0 %v422
    %433 = vmatprep.subr.mxu0 0.0
    %434 = vmatpush1.msra.mxu0 0.0
    %435 = vmatprep.subr.mxu0 0.0
    %436 = vmatpush1.msra.mxu0 0.0
    %437 = vmatprep.subr.mxu0 0.0
    %438 = vmatpush1.msra.mxu0 0.0
    %439 = vmatprep.subr.mxu0 0.0
    %440 = vmatpush1.msra.mxu0 0.0
    %441 = vmatprep.subr.mxu0 0.0
    %442 = vmatpush1.msra.mxu0 0.0
    %443 = vmatprep.subr.mxu0 0.0
    %444 = vmatpush1.msra.mxu0 0.0
    %445 = vmatprep.subr.mxu0 0.0
    %446 = vmatpush1.msra.mxu0 0.0
    %447 = vmatprep.subr.mxu0 0.0
    %448 = vmatpush1.msra.mxu0 0.0
    %449 = vmatprep.subr.mxu0 0.0
    %450 = vmatpush1.msra.mxu0 0.0
    %451 = vmatprep.subr.mxu0 0.0
    %452 = vmatpush1.msra.mxu0 0.0
    %453 = vmatprep.subr.mxu0 0.0
    %454 = vmatpush1.msra.mxu0 0.0
    %455 = vmatprep.subr.mxu0 0.0
    %456 = vmatpush1.msra.mxu0 0.0
    %457 = vmatprep.subr.mxu0 0.0
    %458 = vmatpush1.msra.mxu0 0.0
    %459 = vmatprep.subr.mxu0 0.0
    %460 = vmatpush1.msra.mxu0 0.0
    %461 = vmatprep.subr.mxu0 0.0
    %462 = vmatpush1.msra.mxu0 0.0
    %463 = vmatprep.subr.mxu0 0.0
    %464 = vmatpush1.msra.mxu0 0.0
    %465 = vmatprep.subr.mxu0 0.0
    %466 = vmatpush1.msra.mxu0 0.0
    %467 = vmatprep.subr.mxu0 0.0
    %468 = vmatpush1.msra.mxu0 0.0
    %469 = vmatprep.subr.mxu0 0.0
    %470 = vmatpush1.msra.mxu0 0.0
    %471 = vmatprep.subr.mxu0 0.0
    %472 = vmatpush1.msra.mxu0 0.0
    %473 = vmatprep.subr.mxu0 0.0
    %474 = vmatpush1.msra.mxu0 0.0
    %475 = vmatprep.subr.mxu0 0.0
    %476 = vmatpush1.msra.mxu0 0.0
    %477 = vmatprep.subr.mxu0 0.0
    %478 = vmatpush1.msra.mxu0 0.0
    %479 = vmatprep.subr.mxu0 0.0
    %480 = vmatpush1.msra.mxu0 0.0
    %481 = vmatprep.subr.mxu0 0.0
    %482 = vmatpush1.msra.mxu0 0.0
    %483 = vmatprep.subr.mxu0 0.0
    %484 = vmatpush1.msra.mxu0 0.0
    %485 = vmatprep.subr.mxu0 0.0
    %486 = vmatpush1.msra.mxu0 0.0
    %487 = vmatprep.subr.mxu0 0.0
    %488 = vmatpush1.msra.mxu0 0.0
    %489 = vmatprep.mubr.f32.mxu0 0.0
    %490 = vmatmul.mubr.f32.gmra.mrb[0].mxu0 %v224
    %v491 = vpop.f32.mrb[0].mxu0
    %v492 = vadd.f32 0.0, %v491
    %v493 = vpop.f32.mrb[0].mxu0
    %494 = vmatprep.mubr.f32.mxu0 0.0
    %495 = vmatmul.mubr.f32.gmra.mrb[0].mxu0 %v227
    %v496 = vpop.f32.mrb[0].mxu0
    %v497 = vadd.f32 0.0, %v496
    %v498 = vpop.f32.mrb[0].mxu0
    %499 = vmatprep.mubr.f32.mxu0 0.0
    %500 = vmatmul.mubr.f32.gmra.mrb[0].mxu0 %v230
    %v501 = vpop.f32.mrb[0].mxu0
    %v502 = vadd.f32 0.0, %v501
    %v503 = vpop.f32.mrb[0].mxu0
    %504 = vmatprep.mubr.f32.mxu0 0.0
    %505 = vmatmul.mubr.f32.gmra.mrb[0].mxu0 %v233
    %v506 = vpop.f32.mrb[0].mxu0
    %v507 = vadd.f32 0.0, %v506
    %v508 = vpop.f32.mrb[0].mxu0
    %509 = vdwg.mxu0
    %v510 = vmax.f32 %v492, 0.0
    %v511 = vmax.f32 %v497, 0.0
    %v512 = vmax.f32 %v502, 0.0
    %v513 = vmax.f32 %v507, 0.0
    %v514 = vadd.f32 %v320, %v510
    %v515 = vadd.f32 %v321, %v511
    %v516 = vadd.f32 %v322, %v512
    %v517 = vadd.f32 %v323, %v513
    %v518 = vld [vmem:[#allocation11] sm:$0xff]
    %v519 = vld [vmem:[#allocation11 + $0x8] sm:$0xff]
    %v520 = vld [vmem:[#allocation11 + $0x10] sm:$0xff]
    %v521 = vld [vmem:[#allocation11 + $0x18] sm:$0xff]
    %v522 = vld [vmem:[%s6] sm:$0x1]
    %v523 = vlaneseq
    %v524 = vshrl.u32 %v523, 7
    %v525 = vsub.s32 0, %v524
    %v526 = vrot.slane %v522, %v525
    %v528 = vsel %vm125, %v514, 0
    %v531 = vsel %vm125, %v515, 0
    %v534 = vsel %vm125, %v516, 0
    %v537 = vsel %vm125, %v517, 0
    %539 = vmatprep.subr.mxu0 0.0
    %540 = vmatpush1.msra.mxu0 %v518
    %541 = vmatprep.subr.mxu0 0.0
    %542 = vmatpush1.msra.mxu0 %v519
    %543 = vmatprep.subr.mxu0 0.0
    %544 = vmatpush1.msra.mxu0 %v520
    %545 = vmatprep.subr.mxu0 0.0
    %546 = vmatpush1.msra.mxu0 %v521
    %547 = vmatprep.subr.mxu0 0.0
    %548 = vmatpush1.msra.mxu0 0.0
    %549 = vmatprep.subr.mxu0 0.0
    %550 = vmatpush1.msra.mxu0 0.0
    %551 = vmatprep.subr.mxu0 0.0
    %552 = vmatpush1.msra.mxu0 0.0
    %553 = vmatprep.subr.mxu0 0.0
    %554 = vmatpush1.msra.mxu0 0.0
    %555 = vmatprep.subr.mxu0 0.0
    %556 = vmatpush1.msra.mxu0 0.0
    %557 = vmatprep.subr.mxu0 0.0
    %558 = vmatpush1.msra.mxu0 0.0
    %559 = vmatprep.subr.mxu0 0.0
    %560 = vmatpush1.msra.mxu0 0.0
    %561 = vmatprep.subr.mxu0 0.0
    %562 = vmatpush1.msra.mxu0 0.0
    %563 = vmatprep.subr.mxu0 0.0
    %564 = vmatpush1.msra.mxu0 0.0
    %565 = vmatprep.subr.mxu0 0.0
    %566 = vmatpush1.msra.mxu0 0.0
    %567 = vmatprep.subr.mxu0 0.0
    %568 = vmatpush1.msra.mxu0 0.0
    %569 = vmatprep.subr.mxu0 0.0
    %570 = vmatpush1.msra.mxu0 0.0
    %571 = vmatprep.subr.mxu0 0.0
    %572 = vmatpush1.msra.mxu0 0.0
    %573 = vmatprep.subr.mxu0 0.0
    %574 = vmatpush1.msra.mxu0 0.0
    %575 = vmatprep.subr.mxu0 0.0
    %576 = vmatpush1.msra.mxu0 0.0
    %577 = vmatprep.subr.mxu0 0.0
    %578 = vmatpush1.msra.mxu0 0.0
    %579 = vmatprep.subr.mxu0 0.0
    %580 = vmatpush1.msra.mxu0 0.0
    %581 = vmatprep.subr.mxu0 0.0
    %582 = vmatpush1.msra.mxu0 0.0
    %583 = vmatprep.subr.mxu0 0.0
    %584 = vmatpush1.msra.mxu0 0.0
    %585 = vmatprep.subr.mxu0 0.0
    %586 = vmatpush1.msra.mxu0 0.0
    %587 = vmatprep.subr.mxu0 0.0
    %588 = vmatpush1.msra.mxu0 0.0
    %589 = vmatprep.subr.mxu0 0.0
    %590 = vmatpush1.msra.mxu0 0.0
    %591 = vmatprep.subr.mxu0 0.0
    %592 = vmatpush1.msra.mxu0 0.0
    %593 = vmatprep.subr.mxu0 0.0
    %594 = vmatpush1.msra.mxu0 0.0
    %595 = vmatprep.subr.mxu0 0.0
    %596 = vmatpush1.msra.mxu0 0.0
    %597 = vmatprep.subr.mxu0 0.0
    %598 = vmatpush1.msra.mxu0 0.0
    %599 = vmatprep.subr.mxu0 0.0
    %600 = vmatpush1.msra.mxu0 0.0
    %601 = vmatprep.subr.mxu0 0.0
    %602 = vmatpush1.msra.mxu0 0.0
    %603 = vmatprep.mubr.f32.mxu0 0.0
    %604 = vmatmul.mubr.f32.gmra.mrb[0].mxu0 %v528
    %v605 = vpop.f32.mrb[0].mxu0
    %v606 = vadd.f32 %v526, %v605
    %v607 = vpop.f32.mrb[0].mxu0
    %608 = vmatprep.mubr.f32.mxu0 0.0
    %609 = vmatmul.mubr.f32.gmra.mrb[0].mxu0 %v531
    %v610 = vpop.f32.mrb[0].mxu0
    %v611 = vadd.f32 %v526, %v610
    %v612 = vpop.f32.mrb[0].mxu0
    %613 = vmatprep.mubr.f32.mxu0 0.0
    %614 = vmatmul.mubr.f32.gmra.mrb[0].mxu0 %v534
    %v615 = vpop.f32.mrb[0].mxu0
    %v616 = vadd.f32 %v526, %v615
    %v617 = vpop.f32.mrb[0].mxu0
    %618 = vmatprep.mubr.f32.mxu0 0.0
    %619 = vmatmul.mubr.f32.gmra.mrb[0].mxu0 %v537
    %v620 = vpop.f32.mrb[0].mxu0
    %v621 = vadd.f32 %v526, %v620
    %v622 = vpop.f32.mrb[0].mxu0
    %623 = vdwg.mxu0
    %v624 = vtanh.pop %v606
    %v625 = vtanh.pop %v611
    %v626 = vtanh.pop %v616
    %v627 = vtanh.pop %v621
    %v628 = vxor.u32 %v606, 2147483648
    %v629 = vxor.u32 %v611, 2147483648
    %v630 = vxor.u32 %v616, 2147483648
    %v631 = vxor.u32 %v621, 2147483648
    %v632 = vmul.f32 %v628, 1.442695
    %v633 = vpow.pop %v632
    %v634 = vmul.f32 %v629, 1.442695
    %v635 = vpow.pop %v634
    %v636 = vmul.f32 %v630, 1.442695
    %v637 = vpow.pop %v636
    %v638 = vmul.f32 %v631, 1.442695
    %v639 = vpow.pop %v638
    %v640 = vadd.f32 %v633, 1.0
    %v641 = vadd.f32 %v635, 1.0
    %v642 = vadd.f32 %v637, 1.0
    %v643 = vadd.f32 %v639, 1.0
    %v644 = vrcp.pop %v640
    %v645 = vmul.f32 1.0, %v644
    %v646 = vrcp.pop %v641
    %v647 = vmul.f32 1.0, %v646
    %v648 = vrcp.pop %v642
    %v649 = vmul.f32 1.0, %v648
    %v650 = vrcp.pop %v643
    %v651 = vmul.f32 1.0, %v650
    %656 = vrot.lane.b32.xlu0 %v624, 32
    %v657 = vpop.permute.xlu0 %656
    %658 = vrot.lane.b32.xlu0 %v625, 32
    %v659 = vpop.permute.xlu0 %658
    %660 = vrot.lane.b32.xlu0 %v626, 32
    %v661 = vpop.permute.xlu0 %660
    %662 = vrot.lane.b32.xlu0 %v627, 32
    %v663 = vpop.permute.xlu0 %662
    %v668 = vmul.f32 %v645, %v657
    %v669 = vmul.f32 %v647, %v659
    %v670 = vmul.f32 %v649, %v661
    %v671 = vmul.f32 %v651, %v663
    %676 = vrot.lane.b32.xlu0 %v117, 32
    %v677 = vpop.permute.xlu0 %676
    %678 = vrot.lane.b32.xlu0 %v118, 32
    %v679 = vpop.permute.xlu0 %678
    %680 = vrot.lane.b32.xlu0 %v119, 32
    %v681 = vpop.permute.xlu0 %680
    %682 = vrot.lane.b32.xlu0 %v120, 32
    %v683 = vpop.permute.xlu0 %682
    %v688 = vmul.f32 %v668, %v677
    %v689 = vmul.f32 %v669, %v679
    %v690 = vmul.f32 %v670, %v681
    %v691 = vmul.f32 %v671, %v683
    %vm692 = vcmask 523520
    %v693 = vsel %vm692, %v688, 0.0
    %v694 = vsel %vm692, %v689, 0.0
    %v695 = vadd.f32 %v693, %v694
    %v696 = vrot.slane %v695, 4
    %v697 = vadd.f32 %v695, %v696
    %v698 = vrot.slane %v697, 2
    %v699 = vadd.f32 %v697, %v698
    %v700 = vrot.slane %v699, 1
    %v701 = vadd.f32 %v699, %v700
    %v702 = vsel %vm692, %v690, 0.0
    %v703 = vsel %vm692, %v691, 0.0
    %v704 = vadd.f32 %v702, %v703
    %v705 = vrot.slane %v704, 4
    %v706 = vadd.f32 %v704, %v705
    %v707 = vrot.slane %v706, 2
    %v708 = vadd.f32 %v706, %v707
    %v709 = vrot.slane %v708, 1
    %v710 = vadd.f32 %v708, %v709
    %v711 = vsel %vm692, %v688, -inf
    %v712 = vsel %vm692, %v689, -inf
    %v713 = vmax.f32 %v711, %v712
    %v714 = vrot.slane %v713, 4
    %v715 = vmax.f32 %v713, %v714
    %v716 = vrot.slane %v715, 2
    %v717 = vmax.f32 %v715, %v716
    %v718 = vrot.slane %v717, 1
    %v719 = vmax.f32 %v717, %v718
    %v720 = vsel %vm692, %v690, -inf
    %v721 = vsel %vm692, %v691, -inf
    %v722 = vmax.f32 %v720, %v721
    %v723 = vrot.slane %v722, 4
    %v724 = vmax.f32 %v722, %v723
    %v725 = vrot.slane %v724, 2
    %v726 = vmax.f32 %v724, %v725
    %v727 = vrot.slane %v726, 1
    %v728 = vmax.f32 %v726, %v727
    %v729 = vmul.f32 %v701, %v719
    %v730 = vmul.f32 %v710, %v728
    %s731 = scalar_lea.vmem [#allocation11], 32
    %v732 = vld [vmem:[%s731] sm:$0xff]
    %v733 = vld [vmem:[%s731 + $0x8] sm:$0xff]
    %v734 = vld [vmem:[%s731 + $0x10] sm:$0xff]
    %v735 = vld [vmem:[%s731 + $0x18] sm:$0xff]
    %v736 = vld [vmem:[%s6 + $0x1] sm:$0x1]
    %v737 = vlaneseq
    %v738 = vshrl.u32 %v737, 7
    %v739 = vsub.s32 0, %v738
    %v740 = vrot.slane %v736, %v739
    %vm743 = vcmask 1041409
    %v744 = vsel %vm743, %v730, %v729
    %745 = vrot.lane.b32.xlu0 %v744, 96
    %v746 = vpop.permute.xlu0 %745
    %v747 = vsel %vm125, %v746, 0
    %749 = vmatprep.subr.mxu0 0.0
    %750 = vmatpush1.msra.mxu0 %v732
    %751 = vmatprep.subr.mxu0 0.0
    %752 = vmatpush1.msra.mxu0 %v733
    %753 = vmatprep.subr.mxu0 0.0
    %754 = vmatpush1.msra.mxu0 %v734
    %755 = vmatprep.subr.mxu0 0.0
    %756 = vmatpush1.msra.mxu0 %v735
    %757 = vmatprep.subr.mxu0 0.0
    %758 = vmatpush1.msra.mxu0 0.0
    %759 = vmatprep.subr.mxu0 0.0
    %760 = vmatpush1.msra.mxu0 0.0
    %761 = vmatprep.subr.mxu0 0.0
    %762 = vmatpush1.msra.mxu0 0.0
    %763 = vmatprep.subr.mxu0 0.0
    %764 = vmatpush1.msra.mxu0 0.0
    %765 = vmatprep.subr.mxu0 0.0
    %766 = vmatpush1.msra.mxu0 0.0
    %767 = vmatprep.subr.mxu0 0.0
    %768 = vmatpush1.msra.mxu0 0.0
    %769 = vmatprep.subr.mxu0 0.0
    %770 = vmatpush1.msra.mxu0 0.0
    %771 = vmatprep.subr.mxu0 0.0
    %772 = vmatpush1.msra.mxu0 0.0
    %773 = vmatprep.subr.mxu0 0.0
    %774 = vmatpush1.msra.mxu0 0.0
    %775 = vmatprep.subr.mxu0 0.0
    %776 = vmatpush1.msra.mxu0 0.0
    %777 = vmatprep.subr.mxu0 0.0
    %778 = vmatpush1.msra.mxu0 0.0
    %779 = vmatprep.subr.mxu0 0.0
    %780 = vmatpush1.msra.mxu0 0.0
    %781 = vmatprep.subr.mxu0 0.0
    %782 = vmatpush1.msra.mxu0 0.0
    %783 = vmatprep.subr.mxu0 0.0
    %784 = vmatpush1.msra.mxu0 0.0
    %785 = vmatprep.subr.mxu0 0.0
    %786 = vmatpush1.msra.mxu0 0.0
    %787 = vmatprep.subr.mxu0 0.0
    %788 = vmatpush1.msra.mxu0 0.0
    %789 = vmatprep.subr.mxu0 0.0
    %790 = vmatpush1.msra.mxu0 0.0
    %791 = vmatprep.subr.mxu0 0.0
    %792 = vmatpush1.msra.mxu0 0.0
    %793 = vmatprep.subr.mxu0 0.0
    %794 = vmatpush1.msra.mxu0 0.0
    %795 = vmatprep.subr.mxu0 0.0
    %796 = vmatpush1.msra.mxu0 0.0
    %797 = vmatprep.subr.mxu0 0.0
    %798 = vmatpush1.msra.mxu0 0.0
    %799 = vmatprep.subr.mxu0 0.0
    %800 = vmatpush1.msra.mxu0 0.0
    %801 = vmatprep.subr.mxu0 0.0
    %802 = vmatpush1.msra.mxu0 0.0
    %803 = vmatprep.subr.mxu0 0.0
    %804 = vmatpush1.msra.mxu0 0.0
    %805 = vmatprep.subr.mxu0 0.0
    %806 = vmatpush1.msra.mxu0 0.0
    %807 = vmatprep.subr.mxu0 0.0
    %808 = vmatpush1.msra.mxu0 0.0
    %809 = vmatprep.subr.mxu0 0.0
    %810 = vmatpush1.msra.mxu0 0.0
    %811 = vmatprep.subr.mxu0 0.0
    %812 = vmatpush1.msra.mxu0 0.0
    %813 = vmatprep.mubr.f32.mxu0 0.0
    %814 = vmatmul.mubr.f32.gmra.mrb[0].mxu0 %v747
    %v815 = vpop.f32.mrb[0].mxu0
    %v816 = vadd.f32 %v740, %v815
    %v817 = vpop.f32.mrb[0].mxu0
    %818 = vdwg.mxu0
    %v819 = vtanh.pop %v816
    %s820 = scalar_lea.vmem [#allocation11], 64
    %v821 = vld [vmem:[%s820] sm:$0xff]
    %v822 = vld [vmem:[%s820 + $0x8] sm:$0xff]
    %v823 = vld [vmem:[%s820 + $0x10] sm:$0xff]
    %v824 = vld [vmem:[%s820 + $0x18] sm:$0xff]
    %v825 = vld [vmem:[%s6 + $0x2] sm:$0x1]
    %v826 = vlaneseq
    %v827 = vshrl.u32 %v826, 7
    %v828 = vsub.s32 0, %v827
    %v829 = vrot.slane %v825, %v828
    %v831 = vsel %vm125, %v819, 0
    %833 = vmatprep.subr.mxu0 0.0
    %834 = vmatpush1.msra.mxu0 %v821
    %835 = vmatprep.subr.mxu0 0.0
    %836 = vmatpush1.msra.mxu0 %v822
    %837 = vmatprep.subr.mxu0 0.0
    %838 = vmatpush1.msra.mxu0 %v823
    %839 = vmatprep.subr.mxu0 0.0
    %840 = vmatpush1.msra.mxu0 %v824
    %841 = vmatprep.subr.mxu0 0.0
    %842 = vmatpush1.msra.mxu0 0.0
    %843 = vmatprep.subr.mxu0 0.0
    %844 = vmatpush1.msra.mxu0 0.0
    %845 = vmatprep.subr.mxu0 0.0
    %846 = vmatpush1.msra.mxu0 0.0
    %847 = vmatprep.subr.mxu0 0.0
    %848 = vmatpush1.msra.mxu0 0.0
    %849 = vmatprep.subr.mxu0 0.0
    %850 = vmatpush1.msra.mxu0 0.0
    %851 = vmatprep.subr.mxu0 0.0
    %852 = vmatpush1.msra.mxu0 0.0
    %853 = vmatprep.subr.mxu0 0.0
    %854 = vmatpush1.msra.mxu0 0.0
    %855 = vmatprep.subr.mxu0 0.0
    %856 = vmatpush1.msra.mxu0 0.0
    %857 = vmatprep.subr.mxu0 0.0
    %858 = vmatpush1.msra.mxu0 0.0
    %859 = vmatprep.subr.mxu0 0.0
    %860 = vmatpush1.msra.mxu0 0.0
    %861 = vmatprep.subr.mxu0 0.0
    %862 = vmatpush1.msra.mxu0 0.0
    %863 = vmatprep.subr.mxu0 0.0
    %864 = vmatpush1.msra.mxu0 0.0
    %865 = vmatprep.subr.mxu0 0.0
    %866 = vmatpush1.msra.mxu0 0.0
    %867 = vmatprep.subr.mxu0 0.0
    %868 = vmatpush1.msra.mxu0 0.0
    %869 = vmatprep.subr.mxu0 0.0
    %870 = vmatpush1.msra.mxu0 0.0
    %871 = vmatprep.subr.mxu0 0.0
    %872 = vmatpush1.msra.mxu0 0.0
    %873 = vmatprep.subr.mxu0 0.0
    %874 = vmatpush1.msra.mxu0 0.0
    %875 = vmatprep.subr.mxu0 0.0
    %876 = vmatpush1.msra.mxu0 0.0
    %877 = vmatprep.subr.mxu0 0.0
    %878 = vmatpush1.msra.mxu0 0.0
    %879 = vmatprep.subr.mxu0 0.0
    %880 = vmatpush1.msra.mxu0 0.0
    %881 = vmatprep.subr.mxu0 0.0
    %882 = vmatpush1.msra.mxu0 0.0
    %883 = vmatprep.subr.mxu0 0.0
    %884 = vmatpush1.msra.mxu0 0.0
    %885 = vmatprep.subr.mxu0 0.0
    %886 = vmatpush1.msra.mxu0 0.0
    %887 = vmatprep.subr.mxu0 0.0
    %888 = vmatpush1.msra.mxu0 0.0
    %889 = vmatprep.subr.mxu0 0.0
    %890 = vmatpush1.msra.mxu0 0.0
    %891 = vmatprep.subr.mxu0 0.0
    %892 = vmatpush1.msra.mxu0 0.0
    %893 = vmatprep.subr.mxu0 0.0
    %894 = vmatpush1.msra.mxu0 0.0
    %895 = vmatprep.subr.mxu0 0.0
    %896 = vmatpush1.msra.mxu0 0.0
    %897 = vmatprep.mubr.f32.mxu0 0.0
    %898 = vmatmul.mubr.f32.gmra.mrb[0].mxu0 %v831
    %v899 = vpop.f32.mrb[0].mxu0
    %v900 = vadd.f32 %v829, %v899
    %v901 = vpop.f32.mrb[0].mxu0
    %902 = vdwg.mxu0
    %v903 = vxor.u32 %v900, 2147483648
    %v904 = vmul.f32 %v903, 1.442695
    %v905 = vpow.pop %v904
    %v906 = vadd.f32 %v905, 1.0
    %v907 = vrcp.pop %v906
    %v908 = vmul.f32 1.0, %v907
    %909 = vst [vmem:[#allocation13] sm:$0x3] %v908
    // Predicated region
    $region54: #{tpu_custom_call.1} parent=1 // pred_check
      _
    $region55: #{tpu_custom_call.1} parent=1 // pred_check_branch
      %911 = sbr.rel (0) target = $region57
    $region56: #{tpu_custom_call.1} parent=1 // pred_region
      %s913 = ssub.s32 32, 32
      %914 = vsyncadd [#allocation4], %s913
      %s916 = sshll.u32 [#allocation13], 4
      %s917 = int_to_ptr.vmem [resolvable:$true] %s916
      %919 = dma.vmem_to_hbm [thread:$0]  %s917, 32, %s7, [#allocation4]
    $region57: #{tpu_custom_call.1} parent=1 // pred_fallthru
      _
    // Predicated region
    $region58: #{tpu_custom_call.1} parent=1 // pred_check
      _
    $region59: #{tpu_custom_call.1} parent=1 // pred_check_branch
      %921 = sbr.rel (0) target = $region61
    $region60: #{tpu_custom_call.1} parent=1 // pred_region
      %922 = dma.done [#allocation4], 32
    $region61: #{tpu_custom_call.1} parent=1 // pred_fallthru
      _
    %923 = vsyncpa [#allocation3], 1
    %924 = vsyncpa [#allocation6], 1
    %925 = vsyncpa [#allocation9], 1
    %926 = vsyncpa [#allocation12], 1
    %927 = vsyncpa [#allocation4], 1

</llo_original>
